<compile_context>
chip_gen: v7x
topology: tpu7x:2x2x1
jax: 0.10.0
libtpu: 0.0.40
codegen_flags: <defaults>
</compile_context>

<pallas_src>
import jax
import jax.numpy as jnp
from jax.experimental import pallas as pl
from jax.experimental.pallas import tpu as pltpu


def _round_up(x, m):
    return ((x + m - 1) // m) * m


def _default_max_row_tile():
    """Device-aware cap on the patch-row tile (perf review: 256 on v5e,
    1024 on v6e/v7x)."""
    try:
        kind = jax.devices()[0].device_kind.lower()
    except Exception:
        return 512
    if "v5e" in kind or "v5 lite" in kind or "v5lite" in kind:
        return 256
    return 1024


def _pick_row_tile(n_rows, batch, max_tile):
    """Pick a row tile (multiple of 8) that divides n_rows if possible, while
    keeping the total grid length >= 2 (both v7x TensorCores busy)."""
    candidates = [t for t in (1024, 512, 384, 256, 192, 128, 96, 64, 32, 16, 8)
                  if t <= max_tile]
    divisors = [t for t in candidates if n_rows % t == 0]
    for tn in divisors:
        if (n_rows // tn) * batch >= 2:
            return tn, n_rows
    if divisors:                     # e.g. n_rows == 8 and batch == 1
        return divisors[0], n_rows
    tn = min(256, max_tile)          # fall back to padding the rows
    return tn, _round_up(n_rows, tn)


def _embed_kernel(patches_ref, w_ref, posb_ref, out_ref):
    # patches_ref: (TN, K) bf16   w_ref: (K, Dp) bf16   posb_ref: (TN, Dp) f32
    acc = jnp.dot(patches_ref[...], w_ref[...],
                  preferred_element_type=jnp.float32)
    out_ref[...] = (acc + posb_ref[...]).astype(out_ref.dtype)


def siglip_image_embedding(pixels, conv_weight, conv_bias, pos_embedding,
                           patch_size, *, compute_dtype=jnp.bfloat16,
                           out_dtype=None, max_row_tile=None):
    """pixels: (B, C, H, W) NCHW
       conv_weight: (D, C, P, P)  (PyTorch Conv2d layout)
       conv_bias: (D,)
       pos_embedding: (N, D) with N = (H//P)*(W//P)
       returns: (B, N, D) in out_dtype (default: pixels.dtype; pass
       jnp.bfloat16 to halve the output HBM stream when acceptable)."""
    B, C, H, W = pixels.shape
    P = patch_size
    D = conv_weight.shape[0]
    assert H % P == 0 and W % P == 0, "image size must be a multiple of patch size"
    Hp, Wp = H // P, W // P
    N = Hp * Wp
    K = C * P * P
    assert conv_weight.shape == (D, C, P, P)
    assert conv_bias.shape == (D,)
    assert pos_embedding.shape == (N, D), "pos embedding rows must equal num patches"
    if out_dtype is None:
        out_dtype = pixels.dtype
    if max_row_tile is None:
        max_row_tile = _default_max_row_tile()

    Dp = _round_up(D, 128)                 # lane-dense output stores
    TN, Np = _pick_row_tile(N, B, max_row_tile)
    tiles_per_batch = Np // TN

    # --- unfold NCHW -> (B, N, K) in (c, kh, kw) order.  Cast to bf16 FIRST so
    # XLA fuses convert+transpose into one pass that writes half the bytes.
    # K is NOT padded in HBM (full-extent block dims are allowed; Mosaic pads
    # in VMEM).
    patches = pixels.astype(compute_dtype).reshape(B, C, Hp, P, Wp, P)
    patches = patches.transpose(0, 2, 4, 1, 3, 5).reshape(B, N, K)
    if Np != N:
        patches = jnp.pad(patches, ((0, 0), (0, Np - N), (0, 0)))

    # --- flatten conv weight to (K, D) bf16; pad D only (usually Dp == D) ---
    w = conv_weight.reshape(D, K).T.astype(compute_dtype)
    if Dp != D:
        w = jnp.pad(w, ((0, 0), (0, Dp - D)))

    # --- fold the conv bias into the position embedding once (kept f32: with
    # the 2-D grid it is only streamed once per row tile, not per batch) ---
    posb = pos_embedding.astype(jnp.float32) + conv_bias.astype(jnp.float32)[None, :]
    if Np != N or Dp != D:
        posb = jnp.pad(posb, ((0, Np - N), (0, Dp - D)))

    # --- grid: (row tiles, batch) with batch innermost -> posb block index is
    # constant across the inner axis (no re-DMA across batches) ---
    grid = (tiles_per_batch, B)

    out_isize = jnp.dtype(out_dtype).itemsize
    # Per-step working set (double-buffered inputs/outputs, single-buffered
    # weight) -> explicit scoped-VMEM limit with margin, clamped for v7x.
    working = (2 * TN * K * 2 + 2 * TN * Dp * 4 + 2 * TN * Dp * out_isize
               + K * Dp * 2)
    vmem_limit = min(max(working + (4 << 20), 16 << 20), 48 << 20)

    cost = pl.CostEstimate(
        flops=2 * B * Np * K * Dp,
        bytes_accessed=(B * Np * K * 2          # patches (bf16)
                        + K * Dp * 2            # weight (bf16, resident)
                        + Np * Dp * 4           # pos+bias (f32, read ~once)
                        + B * Np * Dp * out_isize),
        transcendentals=0)

    out = pl.pallas_call(
        _embed_kernel,
        out_shape=jax.ShapeDtypeStruct((B, Np, Dp), out_dtype),
        grid_spec=pltpu.PrefetchScalarGridSpec(
            num_scalar_prefetch=0,
            grid=grid,
            in_specs=[
                # patch rows: (B, Np, K) -> (TN, K) per step
                pl.BlockSpec((pl.Squeezed(), TN, K), lambda r, b: (b, r, 0)),
                # weight: VMEM-resident, constant index -> single buffer
                pl.BlockSpec((K, Dp), lambda r, b: (0, 0),
                             pipeline_mode=pl.Buffered(1)),
                # pos+bias tile: index constant across the inner batch axis
                pl.BlockSpec((TN, Dp), lambda r, b: (r, 0)),
            ],
            out_specs=pl.BlockSpec((pl.Squeezed(), TN, Dp),
                                   lambda r, b: (b, r, 0)),
        ),
        compiler_params=pltpu.CompilerParams(
            dimension_semantics=("parallel", "parallel"),
            vmem_limit_bytes=int(vmem_limit)),
        cost_estimate=cost,
    )(patches, w, posb)

    if Np != N or Dp != D:
        out = out[:, :N, :D]
    return out


if __name__ == "__main__":
    # Small config consistent with the module: C=3, image=32, patch=8 -> N=16, D=128.
    B, C, IMG, P, D = 2, 3, 32, 8, 128
    N = (IMG // P) ** 2
    K = C * P * P

    key = jax.random.PRNGKey(0)
    k_px, k_w, k_b, k_pos = jax.random.split(key, 4)

    pixels = jax.random.normal(k_px, (B, C, IMG, IMG), dtype=jnp.float32)
    conv_weight = jax.random.normal(k_w, (D, C, P, P), dtype=jnp.float32) * 0.02
    conv_bias = jax.random.normal(k_b, (D,), dtype=jnp.float32) * 0.02
    pos_embedding = jax.random.normal(k_pos, (N, D), dtype=jnp.float32) * 0.02

    out = siglip_image_embedding(pixels, conv_weight, conv_bias, pos_embedding, P)
    out = jax.block_until_ready(out)

    # Pure-JAX f32 reference (strided conv + flatten + transpose + pos-emb add).
    ref_conv = jax.lax.conv_general_dilated(
        pixels, conv_weight, window_strides=(P, P), padding="VALID",
        dimension_numbers=("NCHW", "OIHW", "NCHW"))
    ref = (ref_conv.reshape(B, D, N).transpose(0, 2, 1)
           + conv_bias[None, None, :] + pos_embedding[None, :, :])

    assert out.shape == (B, N, D)
    # bf16 inputs with f32 MXU accumulation -> loose-but-meaningful tolerance.
    assert jnp.allclose(out, ref, atol=2e-2, rtol=2e-2)

    print("KERNEL_OK")
</pallas_src>

<mosaic_0001>
module attributes {stable_mosaic.version = 11 : i64} {
  func.func @_embed_kernel(%arg0: i32, %arg1: i32, %arg2: memref<1x16x192xbf16, #tpu.memory_space<vmem>>, %arg3: memref<192x128xbf16, #tpu.memory_space<vmem>>, %arg4: memref<16x128xf32, #tpu.memory_space<vmem>>, %arg5: memref<1x16x128xf32, #tpu.memory_space<vmem>>) attributes {dimension_semantics = [#tpu.dimension_semantics<parallel>, #tpu.dimension_semantics<parallel>], iteration_bounds = array<i64: 1, 2>, scalar_prefetch = 0 : i64, scratch_operands = 0 : i64, tpu.core_type = #tpu.core_type<tc>, window_params = [{transform_indices = @transform_0, window_bounds = array<i64: 1, 16, 192>}, {pipeline_mode = #tpu.pipeline_mode<synchronous>, transform_indices = @transform_1, window_bounds = array<i64: 192, 128>}, {transform_indices = @transform_2, window_bounds = array<i64: 16, 128>}, {transform_indices = @transform_3, window_bounds = array<i64: 1, 16, 128>}]} {
    %c0 = arith.constant 0 : index
    %c0_0 = arith.constant 0 : index
    %c0_1 = arith.constant 0 : index
    %0 = vector.load %arg2[%c0, %c0_0, %c0_1] : memref<1x16x192xbf16, #tpu.memory_space<vmem>>, vector<1x16x192xbf16>
    %1 = vector.shape_cast %0 : vector<1x16x192xbf16> to vector<16x192xbf16>
    %c0_2 = arith.constant 0 : index
    %c0_3 = arith.constant 0 : index
    %2 = vector.load %arg3[%c0_2, %c0_3] : memref<192x128xbf16, #tpu.memory_space<vmem>>, vector<192x128xbf16>
    %cst = arith.constant dense<0.000000e+00> : vector<16x128xf32>
    %3 = tpu.matmul %1, %2, %cst {dimension_numbers = #tpu.dot_dimension_numbers<[1], [0], [0], [1], [0, 0, 1, 1], [], []>} : vector<16x192xbf16>, vector<192x128xbf16>, vector<16x128xf32> -> vector<16x128xf32>
    %c0_4 = arith.constant 0 : index
    %c0_5 = arith.constant 0 : index
    %4 = vector.load %arg4[%c0_4, %c0_5] : memref<16x128xf32, #tpu.memory_space<vmem>>, vector<16x128xf32>
    %5 = arith.addf %3, %4 : vector<16x128xf32>
    %c0_6 = arith.constant 0 : index
    %c0_7 = arith.constant 0 : index
    %c0_8 = arith.constant 0 : index
    %6 = vector.load %arg5[%c0_6, %c0_7, %c0_8] : memref<1x16x128xf32, #tpu.memory_space<vmem>>, vector<1x16x128xf32>
    %7 = vector.shape_cast %6 : vector<1x16x128xf32> to vector<16x128xf32>
    %8 = vector.shape_cast %5 : vector<16x128xf32> to vector<1x16x128xf32>
    tpu.vector_store %arg5[%c0_6, %c0_7, %c0_8], %8 {strides = array<i32>} : memref<1x16x128xf32, #tpu.memory_space<vmem>>, vector<1x16x128xf32>,
    return
  }
  func.func @transform_0(%arg0: i32, %arg1: i32) -> (i32, i32, i32) {
    %c0_i32 = arith.constant 0 : i32
    %c0_i32_0 = arith.constant 0 : i32
    return %arg1, %arg0, %c0_i32 : i32, i32, i32
  }
  func.func @transform_1(%arg0: i32, %arg1: i32) -> (i32, i32) {
    %c0_i32 = arith.constant 0 : i32
    %c0_i32_0 = arith.constant 0 : i32
    %c0_i32_1 = arith.constant 0 : i32
    return %c0_i32, %c0_i32_0 : i32, i32
  }
  func.func @transform_2(%arg0: i32, %arg1: i32) -> (i32, i32) {
    %c0_i32 = arith.constant 0 : i32
    %c0_i32_0 = arith.constant 0 : i32
    return %arg0, %c0_i32 : i32, i32
  }
  func.func @transform_3(%arg0: i32, %arg1: i32) -> (i32, i32, i32) {
    %c0_i32 = arith.constant 0 : i32
    %c0_i32_0 = arith.constant 0 : i32
    return %arg1, %arg0, %c0_i32 : i32, i32, i32
  }
}

</mosaic_0001>

<llo_original>
// kernel: tpu_custom_call.1
$region0: #{tpu_custom_call.1}
  #allocation0 [shape = 'u32[]', space=smem, size = 0x4, offset = 0x4, fixed_abs, tag = 'smem constant byte address 0x4 - core index']
  #allocation1 [shape = 'u32[144,128]{1,0:T(1,128)}', space=vmem, size = 0x12000, scoped, tag = 'internal scratch']
  %s0 = inlined_call_operand.hbm [shape: bf16[2,16,192], index: 0, kind: input, shape index: {}]
  %s1 = inlined_call_operand.hbm [shape: bf16[192,128], index: 1, kind: input, shape index: {}]
  %s2 = inlined_call_operand.hbm [shape: f32[16,128], index: 2, kind: input, shape index: {}]
  %s3 = inlined_call_operand.hbm [shape: f32[2,16,128], index: 3, kind: output, shape index: {}]
  %s4 = sld [smem:[#allocation0]]
  $region57: #{tpu_custom_call.1} parent=0
    _
  %s6 = ssub.s32 1, %s4
  %s7 = scalar_select 0, %s6, %s4
  $region1: #{tpu_custom_call.1} parent=0
    #allocation2 [shape = 'u8[16384]{0}', space=vmem, size = 0x4000, scoped, tag = 'input window, operand 0']
    #allocation3 [shape = 's32[2]{0}', space=sflag, size = 0x8, scoped, tag = 'scoped memory for tpu_custom_call.1']
    #allocation4 [shape = 's32[2]{0}', space=sflag, size = 0x8, scoped, tag = 'scoped memory for tpu_custom_call.1']
    #allocation5 [shape = 'u8[49152]{0}', space=vmem, size = 0xc000, scoped, tag = 'input window, operand 1, single buffered']
    #allocation6 [shape = 's32[1]{0}', space=sflag, size = 0x4, scoped, tag = 'scoped memory for tpu_custom_call.1']
    #allocation7 [shape = 'u8[8192]{0}', space=vmem, size = 0x2000, scoped, tag = 'input window, operand 2, single buffered']
    #allocation8 [shape = 'u8[16384]{0}', space=vmem, size = 0x4000, scoped, tag = 'output window, operand 0']
    %8 = vsyncpa [#allocation3], 0
    %s9 = scalar_lea.sflag [#allocation3], 1
    %10 = vsyncpa %s9, 0
    %11 = vsyncpa [#allocation6], 0
    %12 = vsyncpa [#allocation4], 0
    %s13 = scalar_lea.sflag [#allocation4], 1
    %14 = vsyncpa %s13, 0
    loop: start=0, step=1, limit=4
    $region2: #{tpu_custom_call.1} parent=1 // loop_pre_header
      _
    $region3: #{tpu_custom_call.1} parent=1 // loop_header
      %s16 = sphi 0, %s20
      %p17 = scmp.ge.s32.totalorder %s16, 4
      %s23 = sphi 0, %s35
      %s24 = sphi 0, %s31
      %s25 = sphi 0, %s23
      %s26 = sphi 0, %s24
      %s27 = sphi 0, %s25
      %s28 = sphi 0, %s26
      %s40 = sphi 0, %s42
      %s43 = sphi 0, %s40
      %s44 = sphi 0, %s43
      %s60 = sphi 0, %s44
      %s64 = sphi 0, %s64
      %s66 = sphi 0, %s64
      %s67 = sphi 0, %s66
      %s81 = sphi 0, %s67
      %s87 = sphi 0, %s89
      %s90 = sphi 0, %s87
      %s91 = sphi 0, %s90
      %s107 = sphi 0, %s91
      %s115 = sphi 0, %s117
      %s118 = sphi 0, %s115
      %s119 = sphi 0, %s118
      %s135 = sphi 0, %s119
    $region4: #{tpu_custom_call.1} parent=1 // loop_header_branch
      %19 = sbr.rel (%p17) target = $region8
    $region5: #{tpu_custom_call.1} parent=1 // loop_body
      %s21 = ssub.s32 %s16, 1
      %s22 = ssub.s32 %s16, 2
      %s29 = sadd.s32 1, %s24
      %p30 = scmp.ge.s32.totalorder %s29, 2
      %s31 = scalar_select %p30, 0, %s29
      %s32 = sadd.s32 1, %s23
      %s33 = scalar_select %p30, %s32, %s23
      %p34 = scmp.ge.s32.totalorder %s33, 1
      %s35 = scalar_select %p34, 0, %s33
      %s36 = ssub.s32 %s24, %s31
      %s37 = ssub.s32 %s23, %s35
      %s38 = sor.u32 %s36, %s37
      %p39 = scmp.eq.s32.totalorder %s38, 0
      %s41 = sadd.s32 %s40, 1
      %s42 = scalar_select %p39, %s40, %s41
      %p45 = pneg %p39
      %p46 = scmp.eq.s32.totalorder %s16, 1
      %p47 = por %p45, %p46
      %p48 = scmp.ne.s32.totalorder %s40, %s43
      %p49 = scmp.eq.s32.totalorder %s16, 0
      %p50 = por %p48, %p49
      %p51 = scmp.ne.s32.totalorder %s40, %s43
      %p52 = scmp.eq.s32.totalorder %s21, 1
      %p53 = por %p51, %p52
      %p54 = scmp.ne.s32.totalorder %s43, %s44
      %p55 = scmp.eq.s32.totalorder %s21, 0
      %p56 = por %p54, %p55
      %p57 = scmp.ne.s32.totalorder %s43, %s44
      %p58 = scmp.eq.s32.totalorder %s22, 1
      %p59 = por %p57, %p58
      %p61 = scmp.ne.s32.totalorder %s44, %s60
      %p62 = scmp.eq.s32.totalorder %s22, 0
      %p63 = por %p61, %p62
      %s65 = sadd.s32 %s64, 1
      %p68 = scmp.eq.s32.totalorder %s16, 1
      %p69 = scmp.ne.s32.totalorder %s64, %s66
      %p70 = scmp.eq.s32.totalorder %s16, 0
      %p71 = por %p69, %p70
      %p72 = scmp.ne.s32.totalorder %s64, %s66
      %p73 = scmp.eq.s32.totalorder %s21, 1
      %p74 = por %p72, %p73
      %p75 = scmp.ne.s32.totalorder %s66, %s67
      %p76 = scmp.eq.s32.totalorder %s21, 0
      %p77 = por %p75, %p76
      %p78 = scmp.ne.s32.totalorder %s66, %s67
      %p79 = scmp.eq.s32.totalorder %s22, 1
      %p80 = por %p78, %p79
      %p82 = scmp.ne.s32.totalorder %s67, %s81
      %p83 = scmp.eq.s32.totalorder %s22, 0
      %p84 = por %p82, %p83
      %s85 = ssub.s32 %s23, %s35
      %p86 = scmp.eq.s32.totalorder %s85, 0
      %s88 = sadd.s32 %s87, 1
      %s89 = scalar_select %p86, %s87, %s88
      %p92 = pneg %p86
      %p93 = scmp.eq.s32.totalorder %s16, 1
      %p94 = por %p92, %p93
      %p95 = scmp.ne.s32.totalorder %s87, %s90
      %p96 = scmp.eq.s32.totalorder %s16, 0
      %p97 = por %p95, %p96
      %p98 = scmp.ne.s32.totalorder %s87, %s90
      %p99 = scmp.eq.s32.totalorder %s21, 1
      %p100 = por %p98, %p99
      %p101 = scmp.ne.s32.totalorder %s90, %s91
      %p102 = scmp.eq.s32.totalorder %s21, 0
      %p103 = por %p101, %p102
      %p104 = scmp.ne.s32.totalorder %s90, %s91
      %p105 = scmp.eq.s32.totalorder %s22, 1
      %p106 = por %p104, %p105
      %p108 = scmp.ne.s32.totalorder %s91, %s107
      %p109 = scmp.eq.s32.totalorder %s22, 0
      %p110 = por %p108, %p109
      %s111 = ssub.s32 %s24, %s31
      %s112 = ssub.s32 %s23, %s35
      %s113 = sor.u32 %s111, %s112
      %p114 = scmp.eq.s32.totalorder %s113, 0
      %s116 = sadd.s32 %s115, 1
      %s117 = scalar_select %p114, %s115, %s116
      %p120 = pneg %p114
      %p121 = scmp.eq.s32.totalorder %s16, 1
      %p122 = por %p120, %p121
      %p123 = scmp.ne.s32.totalorder %s115, %s118
      %p124 = scmp.eq.s32.totalorder %s16, 0
      %p125 = por %p123, %p124
      %p126 = scmp.ne.s32.totalorder %s115, %s118
      %p127 = scmp.eq.s32.totalorder %s21, 1
      %p128 = por %p126, %p127
      %p129 = scmp.ne.s32.totalorder %s118, %s119
      %p130 = scmp.eq.s32.totalorder %s21, 0
      %p131 = por %p129, %p130
      %p132 = scmp.ne.s32.totalorder %s118, %s119
      %p133 = scmp.eq.s32.totalorder %s22, 1
      %p134 = por %p132, %p133
      %p136 = scmp.ne.s32.totalorder %s119, %s135
      %p137 = scmp.eq.s32.totalorder %s22, 0
      %p138 = por %p136, %p137
      %p139 = scmp.le.s32.totalorder 1, %s16
      %p140 = scmp.lt.s32.totalorder %s16, 3
      %p141 = pnand %p139, %p140
      %p142 = pneg %p141
      // Predicated region
      $region9: #{tpu_custom_call.1} parent=5 // pred_check
        _
      $region10: #{tpu_custom_call.1} parent=5 // pred_check_branch
        %144 = sbr.rel (%p141) target = $region12
      $region11: #{tpu_custom_call.1} parent=5 // pred_region
        %s145 = ssub.s32 %s16, 1
        // Predicated region
        $region13: #{tpu_custom_call.1} parent=11 // pred_check
          %p146 = pneg %p77
        $region14: #{tpu_custom_call.1} parent=11 // pred_check_branch
          %148 = sbr.rel (%p146) target = $region16
        $region15: #{tpu_custom_call.1} parent=11 // pred_region
          %s150 = ssub.s32 1536, 1536
          %151 = vsyncadd [#allocation6], %s150
          %s152 = sshll.u32 [#allocation5], 4
          %s153 = int_to_ptr.vmem [resolvable:$true] %s152
          %158 = dma.hbm_to_vmem [thread:$0]  %s1, 1536, %s153, [#allocation6], 64, 64, 4
        $region16: #{tpu_custom_call.1} parent=11 // pred_fallthru
          _
        // Predicated region
        $region17: #{tpu_custom_call.1} parent=11 // pred_check
          %p159 = pneg %p103
        $region18: #{tpu_custom_call.1} parent=11 // pred_check_branch
          %161 = sbr.rel (%p159) target = $region20
        $region19: #{tpu_custom_call.1} parent=11 // pred_region
          %s162 = smul.u32 2, %s25
          %s164 = ssub.s32 256, 256
          %165 = vsyncadd [#allocation6], %s164
          %s166 = smul.addr %s162, 128
          %s167 = scalar_lea.hbm %s2, %s166
          %s168 = sshll.u32 [#allocation7], 4
          %s169 = int_to_ptr.vmem [resolvable:$true] %s168
          %174 = dma.hbm_to_vmem [thread:$0]  %s167, 256, %s169, [#allocation6], 128, 128, 8
        $region20: #{tpu_custom_call.1} parent=11 // pred_fallthru
          _
      $region12: #{tpu_custom_call.1} parent=5 // pred_fallthru
        _
      %p175 = scmp.lt.s32.totalorder %s16, 2
      // Predicated region
      $region21: #{tpu_custom_call.1} parent=5 // pred_check
        %p176 = pneg %p175
      $region22: #{tpu_custom_call.1} parent=5 // pred_check_branch
        %178 = sbr.rel (%p176) target = $region24
      $region23: #{tpu_custom_call.1} parent=5 // pred_region
        // Predicated region
        $region25: #{tpu_custom_call.1} parent=23 // pred_check
          %p179 = pneg %p50
        $region26: #{tpu_custom_call.1} parent=23 // pred_check_branch
          %181 = sbr.rel (%p179) target = $region28
        $region27: #{tpu_custom_call.1} parent=23 // pred_region
          %s182 = sand.u32 %s40, 1
          %s183 = scalar_lea.sflag [#allocation3], %s182
          %s184 = sand.u32 %s40, 1
          %s185 = smul.addr %s184, 16
          %s186 = scalar_lea.vmem [#allocation2], %s185
          %s187 = smul.u32 2, %s23
          %s189 = ssub.s32 256, 256
          %190 = vsyncadd %s183, %s189
          %s191 = smul.addr %s187, 2
          %s192 = smul.addr %s24, 4
          %s193 = sadd.s32 %s191, %s192
          %s194 = smul.addr %s193, 64
          %s195 = scalar_lea.hbm %s0, %s194
          %s196 = sshll.u32 %s186, 4
          %s197 = int_to_ptr.vmem [resolvable:$true] %s196
          %202 = dma.hbm_to_vmem [thread:$0]  %s195, 256, %s197, %s183, 128, 128, 8
        $region28: #{tpu_custom_call.1} parent=23 // pred_fallthru
          _
      $region24: #{tpu_custom_call.1} parent=5 // pred_fallthru
        _
      %p203 = scmp.le.s32.totalorder 1, %s16
      %p204 = scmp.lt.s32.totalorder %s16, 3
      %p205 = pnand %p203, %p204
      %p206 = pneg %p205
      // Predicated region
      $region29: #{tpu_custom_call.1} parent=5 // pred_check
        _
      $region30: #{tpu_custom_call.1} parent=5 // pred_check_branch
        %208 = sbr.rel (%p205) target = $region32
      $region31: #{tpu_custom_call.1} parent=5 // pred_region
        %s209 = ssub.s32 %s16, 1
        %s210 = sand.u32 %s43, 1
        %s211 = scalar_lea.sflag [#allocation3], %s210
        %s212 = sand.u32 %s43, 1
        %s213 = smul.addr %s212, 16
        %s214 = scalar_lea.vmem [#allocation2], %s213
        // Predicated region
        $region33: #{tpu_custom_call.1} parent=31 // pred_check
          %p215 = pneg %p56
        $region34: #{tpu_custom_call.1} parent=31 // pred_check_branch
          %217 = sbr.rel (%p215) target = $region36
        $region35: #{tpu_custom_call.1} parent=31 // pred_region
          %218 = dma.done %s211, 256
        $region36: #{tpu_custom_call.1} parent=31 // pred_fallthru
          _
        // Predicated region
        $region37: #{tpu_custom_call.1} parent=31 // pred_check
          %p219 = pneg %p77
        $region38: #{tpu_custom_call.1} parent=31 // pred_check_branch
          %221 = sbr.rel (%p219) target = $region40
        $region39: #{tpu_custom_call.1} parent=31 // pred_region
          %222 = dma.done [#allocation6], 1536
        $region40: #{tpu_custom_call.1} parent=31 // pred_fallthru
          _
        // Predicated region
        $region41: #{tpu_custom_call.1} parent=31 // pred_check
          %p223 = pneg %p103
        $region42: #{tpu_custom_call.1} parent=31 // pred_check_branch
          %225 = sbr.rel (%p223) target = $region44
        $region43: #{tpu_custom_call.1} parent=31 // pred_region
          %226 = dma.done [#allocation6], 256
        $region44: #{tpu_custom_call.1} parent=31 // pred_fallthru
          _
        %s227 = sand.u32 %s43, 1
        %s228 = scalar_lea.sflag [#allocation3], %s227
        %s229 = sand.u32 %s43, 1
        %s230 = smul.addr %s229, 16
        %s231 = scalar_lea.vmem [#allocation2], %s230
        %p232 = pneg %p56
        %p233 = pneg %p53
        %p234 = pneg %p77
        %p235 = pneg %p74
        %p236 = pneg %p103
        %p237 = pneg %p100
        %p238 = pneg %p131
        %p239 = pneg %p128
        %s240 = sand.u32 %s118, 1
        %s241 = scalar_lea.sflag [#allocation4], %s240
        %s242 = sand.u32 %s118, 1
        %s243 = smul.addr %s242, 16
        %s244 = scalar_lea.vmem [#allocation8], %s243
        %s245 = smul.u32 2, %s25
        %s246 = smul.u32 2, %s25
        %s247 = smul.u32 2, %s25
        %v249 = vld [vmem:[%s214] sm:$0xff]
        %v250 = vld [vmem:[%s214 + $0x8] sm:$0xff]
        %v251 = vld [vmem:[#allocation5] sm:$0xf]
        %v252 = vld [vmem:[#allocation5 + $0x4] sm:$0xf]
        %v253 = vld [vmem:[#allocation5 + $0x8] sm:$0xf]
        %v254 = vld [vmem:[#allocation5 + $0xc] sm:$0xf]
        %v255 = vld [vmem:[#allocation5 + $0x10] sm:$0xf]
        %v256 = vld [vmem:[#allocation5 + $0x14] sm:$0xf]
        %v257 = vld [vmem:[#allocation5 + $0x18] sm:$0xf]
        %v258 = vld [vmem:[#allocation5 + $0x1c] sm:$0xf]
        %v259 = vld [vmem:[#allocation5 + $0x20] sm:$0xf]
        %v260 = vld [vmem:[#allocation5 + $0x24] sm:$0xf]
        %v261 = vld [vmem:[#allocation5 + $0x28] sm:$0xf]
        %v262 = vld [vmem:[#allocation5 + $0x2c] sm:$0xf]
        %v263 = vld [vmem:[#allocation5 + $0x30] sm:$0xf]
        %v264 = vld [vmem:[#allocation5 + $0x34] sm:$0xf]
        %v265 = vld [vmem:[#allocation5 + $0x38] sm:$0xf]
        %v266 = vld [vmem:[#allocation5 + $0x3c] sm:$0xf]
        %v267 = vld [vmem:[#allocation5 + $0x40] sm:$0xf]
        %v268 = vld [vmem:[#allocation5 + $0x44] sm:$0xf]
        %v269 = vld [vmem:[#allocation5 + $0x48] sm:$0xf]
        %v270 = vld [vmem:[#allocation5 + $0x4c] sm:$0xf]
        %v271 = vld [vmem:[#allocation5 + $0x50] sm:$0xf]
        %v272 = vld [vmem:[#allocation5 + $0x54] sm:$0xf]
        %v273 = vld [vmem:[#allocation5 + $0x58] sm:$0xf]
        %v274 = vld [vmem:[#allocation5 + $0x5c] sm:$0xf]
        %v275 = vld [vmem:[#allocation7] sm:$0xff]
        %v276 = vld [vmem:[#allocation7 + $0x8] sm:$0xff]
        %v279 = vunpack.c.l.b16 %v249
        %v280 = vunpack.c.h.b16 %v249
        %v281 = vunpack.c.l.b16 %v250
        %v282 = vunpack.c.h.b16 %v250
        %v283 = vpack.c.b16 %v281, %v279
        %v284 = vpack.c.b16 %v282, %v280
        %v310 = vunpack.c.l.b16 %v251
        %v311 = vunpack.c.l.b16 %v252
        %v312 = vunpack.c.l.b16 %v253
        %v313 = vunpack.c.l.b16 %v254
        %v314 = vunpack.c.l.b16 %v255
        %v315 = vunpack.c.l.b16 %v256
        %v316 = vunpack.c.l.b16 %v257
        %v317 = vunpack.c.l.b16 %v258
        %v318 = vunpack.c.l.b16 %v259
        %v319 = vunpack.c.l.b16 %v260
        %v320 = vunpack.c.l.b16 %v261
        %v321 = vunpack.c.l.b16 %v262
        %v322 = vunpack.c.l.b16 %v263
        %v323 = vunpack.c.l.b16 %v264
        %v324 = vunpack.c.l.b16 %v265
        %v325 = vunpack.c.l.b16 %v266
        %v326 = vunpack.c.l.b16 %v267
        %v327 = vunpack.c.l.b16 %v268
        %v328 = vunpack.c.l.b16 %v269
        %v329 = vunpack.c.l.b16 %v270
        %v330 = vunpack.c.l.b16 %v271
        %v331 = vunpack.c.l.b16 %v272
        %v332 = vunpack.c.l.b16 %v273
        %v333 = vunpack.c.l.b16 %v274
        %v334 = vpack.c.b16 %v311, %v310
        %v335 = vpack.c.b16 %v313, %v312
        %v336 = vpack.c.b16 %v315, %v314
        %v337 = vpack.c.b16 %v317, %v316
        %v338 = vpack.c.b16 %v319, %v318
        %v339 = vpack.c.b16 %v321, %v320
        %v340 = vpack.c.b16 %v323, %v322
        %v341 = vpack.c.b16 %v325, %v324
        %v342 = vpack.c.b16 %v327, %v326
        %v343 = vpack.c.b16 %v329, %v328
        %v344 = vpack.c.b16 %v331, %v330
        %v345 = vpack.c.b16 %v333, %v332
        %vm358 = vcmask 523264
        %v360 = vsel %vm358, %v284, 0
        %362 = vmatprep.subr.bf16.mxu0 0
        %363 = vmatpush1.bf16.msra.mxu0 %v334
        %364 = vmatprep.subr.bf16.mxu0 0
        %365 = vmatpush1.bf16.msra.mxu0 %v335
        %366 = vmatprep.subr.bf16.mxu0 0
        %367 = vmatpush1.bf16.msra.mxu0 %v336
        %368 = vmatprep.subr.bf16.mxu0 0
        %369 = vmatpush1.bf16.msra.mxu0 %v337
        %370 = vmatprep.subr.bf16.mxu0 0
        %371 = vmatpush1.bf16.msra.mxu0 %v338
        %372 = vmatprep.subr.bf16.mxu0 0
        %373 = vmatpush1.bf16.msra.mxu0 %v339
        %374 = vmatprep.subr.bf16.mxu0 0
        %375 = vmatpush1.bf16.msra.mxu0 %v340
        %376 = vmatprep.subr.bf16.mxu0 0
        %377 = vmatpush1.bf16.msra.mxu0 %v341
        %378 = vmatprep.subr.bf16.mxu0 0
        %379 = vmatpush1.bf16.msra.mxu0 %v342
        %380 = vmatprep.subr.bf16.mxu0 0
        %381 = vmatpush1.bf16.msra.mxu0 %v343
        %382 = vmatprep.subr.bf16.mxu0 0
        %383 = vmatpush1.bf16.msra.mxu0 %v344
        %384 = vmatprep.subr.bf16.mxu0 0
        %385 = vmatpush1.bf16.msra.mxu0 %v345
        %386 = vmatprep.subr.bf16.mxu0 0
        %387 = vmatpush1.bf16.msra.mxu0 0
        %388 = vmatprep.subr.bf16.mxu0 0
        %389 = vmatpush1.bf16.msra.mxu0 0
        %390 = vmatprep.subr.bf16.mxu0 0
        %391 = vmatpush1.bf16.msra.mxu0 0
        %392 = vmatprep.subr.bf16.mxu0 0
        %393 = vmatpush1.bf16.msra.mxu0 0
        %394 = vmatprep.mubr.bf16.mxu0 %v360
        %395 = vmatmul.mubr.bf16.gmra.mrb[0].mxu0 %v283
        %v396 = vpop.f32.mrb[0].mxu0
        %v397 = vadd.f32 %v275, %v396
        %v398 = vpop.f32.mrb[0].mxu0
        %v399 = vpop.f32.mrb[0].mxu0
        %v400 = vadd.f32 %v276, %v399
        %v401 = vpop.f32.mrb[0].mxu0
        %402 = vdwg.mxu0
        %403 = vst [vmem:[%s244] sm:$0xff] %v397
        %404 = vst [vmem:[%s244 + $0x8] sm:$0xff] %v400
        %s405 = sand.u32 %s118, 1
        %s406 = scalar_lea.sflag [#allocation4], %s405
        %s407 = sand.u32 %s118, 1
        %s408 = smul.addr %s407, 16
        %s409 = scalar_lea.vmem [#allocation8], %s408
        // Predicated region
        $region45: #{tpu_custom_call.1} parent=31 // pred_check
          %p410 = pneg %p128
        $region46: #{tpu_custom_call.1} parent=31 // pred_check_branch
          %412 = sbr.rel (%p410) target = $region48
        $region47: #{tpu_custom_call.1} parent=31 // pred_region
          %s413 = smul.u32 2, %s25
          %s415 = ssub.s32 256, 256
          %416 = vsyncadd %s406, %s415
          %s417 = smul.addr %s26, 2
          %s418 = sadd.s32 %s413, %s417
          %s419 = smul.addr %s418, 128
          %s420 = scalar_lea.hbm %s3, %s419
          %s421 = sshll.u32 %s409, 4
          %s422 = int_to_ptr.vmem [resolvable:$true] %s421
          %427 = dma.vmem_to_hbm [thread:$0]  %s422, 256, %s420, %s406, 128, 128, 8
        $region48: #{tpu_custom_call.1} parent=31 // pred_fallthru
          _
      $region32: #{tpu_custom_call.1} parent=5 // pred_fallthru
        _
      %p428 = scmp.le.s32.totalorder 2, %s16
      // Predicated region
      $region49: #{tpu_custom_call.1} parent=5 // pred_check
        %p429 = pneg %p428
      $region50: #{tpu_custom_call.1} parent=5 // pred_check_branch
        %431 = sbr.rel (%p429) target = $region52
      $region51: #{tpu_custom_call.1} parent=5 // pred_region
        %s432 = ssub.s32 %s16, 2
        // Predicated region
        $region53: #{tpu_custom_call.1} parent=51 // pred_check
          %p433 = pneg %p134
        $region54: #{tpu_custom_call.1} parent=51 // pred_check_branch
          %435 = sbr.rel (%p433) target = $region56
        $region55: #{tpu_custom_call.1} parent=51 // pred_region
          %s436 = sand.u32 %s119, 1
          %s437 = scalar_lea.sflag [#allocation4], %s436
          %s438 = sand.u32 %s119, 1
          %s439 = smul.addr %s438, 16
          %s440 = scalar_lea.vmem [#allocation8], %s439
          %441 = dma.done %s437, 256
        $region56: #{tpu_custom_call.1} parent=51 // pred_fallthru
          _
      $region52: #{tpu_custom_call.1} parent=5 // pred_fallthru
        _
    $region6: #{tpu_custom_call.1} parent=1 // loop_footer
      %s20 = sadd.s32 1, %s16
    $region7: #{tpu_custom_call.1} parent=1 // loop_footer_branch
      %15 = sbr.rel target = $region3
    $region8: #{tpu_custom_call.1} parent=1 // loop_exit
      _
    %442 = vsyncpa [#allocation3], 1
    %s443 = scalar_lea.sflag [#allocation3], 1
    %444 = vsyncpa %s443, 1
    %445 = vsyncpa [#allocation6], 1
    %446 = vsyncpa [#allocation4], 1
    %s447 = scalar_lea.sflag [#allocation4], 1
    %448 = vsyncpa %s447, 1

</llo_original>
